<compile_context>
chip_gen: v7x
topology: tpu7x:2x2x1
jax: 0.10.0
libtpu: 0.0.40
codegen_flags: <defaults>
</compile_context>

<pallas_src>
import functools

import jax
import jax.numpy as jnp
from jax.experimental import pallas as pl
from jax.experimental.pallas import tpu as pltpu


def _policy_mlp_kernel(x_ref, w1_ref, b1_ref, w2_ref, b2_ref, mu_ref):
    # fc1 on the MXU with f32 accumulation; bias + ReLU in f32 on the VPU.
    h = jnp.dot(x_ref[...], w1_ref[...], preferred_element_type=jnp.float32)
    h = jnp.maximum(h + b1_ref[...], 0.0)
    # fc2_mean on the MXU, f32 accumulation, then bias.
    mu = jnp.dot(h, w2_ref[...], preferred_element_type=jnp.float32)
    mu_ref[...] = (mu + b2_ref[...]).astype(mu_ref.dtype)


def _round_up(n, m):
    return ((n + m - 1) // m) * m


@functools.partial(jax.jit,
                   static_argnames=("std_mode", "batch_tile", "oneshot_max"))
def policy_forward(x, params, episode_number, std_mode="1",
                   batch_tile=2048, oneshot_max=256):
    """Returns (mu, sigma): the parameters of the Normal action distribution."""
    w1, b1, w2, b2, sigma_param = params
    B, S = x.shape
    H = w1.shape[1]
    A = w2.shape[1]

    if B <= oneshot_max:
        # ---- small-batch / single-shot path: no grid, no pipeline machinery.
        mu = pl.pallas_call(
            _policy_mlp_kernel,
            out_shape=jax.ShapeDtypeStruct((B, A), jnp.float32),
            in_specs=[pl.BlockSpec(memory_space=pltpu.MemorySpace.VMEM)] * 5,
            out_specs=pl.BlockSpec(memory_space=pltpu.MemorySpace.VMEM),
        )(x, w1, b1, w2, b2)
    else:
        # ---- batched rollout path: tile the batch, keep weights resident.
        Bp = _round_up(B, 8)                           # sublane-align rows only
        # Tile size: as big as requested, but keep >= 2 grid steps so the
        # "parallel" axis can shard across v7x's two TensorCores.
        TB = min(batch_tile, _round_up(pl.cdiv(Bp, 2), 8))
        n_tiles = pl.cdiv(Bp, TB)                      # ragged last tile is masked
        x_p = x if Bp == B else jnp.pad(x, ((0, Bp - B), (0, 0)))

        mu_p = pl.pallas_call(
            _policy_mlp_kernel,
            out_shape=jax.ShapeDtypeStruct((Bp, A), jnp.float32),
            grid=(n_tiles,),
            in_specs=[
                pl.BlockSpec((TB, S), lambda i: (i, 0)),   # batch tile of x
                pl.BlockSpec((S, H), lambda i: (0, 0)),    # resident weights
                pl.BlockSpec((1, H), lambda i: (0, 0)),
                pl.BlockSpec((H, A), lambda i: (0, 0)),
                pl.BlockSpec((1, A), lambda i: (0, 0)),
            ],
            out_specs=pl.BlockSpec((TB, A), lambda i: (i, 0)),
            compiler_params=pltpu.CompilerParams(
                dimension_semantics=("parallel",)),        # megacore sharding
        )(x_p, w1, b1, w2, b2)
        mu = mu_p if Bp == B else mu_p[:B]

    # sigma is scalar glue; it lives in the same jit so XLA fuses it with the
    # kernel dispatch (no extra launch).
    if std_mode == "2a":
        ep = jnp.asarray(episode_number, dtype=jnp.float32)
        sigma = 10.0 * jnp.exp(-0.0005 * ep)
    elif std_mode == "2b":
        sigma = jax.nn.softplus(sigma_param)[0]
    else:  # '1'
        sigma = jnp.asarray(5.0, dtype=jnp.float32)

    # TODO(synk): torch returns Normal(mu, sigma); we return its parameters.
    return mu, sigma


def init_policy_params(key, state_space, action_space, hidden=64):
    """Matches Policy.init_weights: normal_(weight), zeros_(bias)."""
    k1, k2 = jax.random.split(key)
    # torch Linear stores weight as (out, in); forward does x @ W.T + b, so we
    # keep the kernel-friendly transposed (in, out) layout.
    w1 = jax.random.normal(k1, (hidden, state_space), dtype=jnp.float32).T   # (S, H)
    w2 = jax.random.normal(k2, (action_space, hidden), dtype=jnp.float32).T  # (H, A)
    b1 = jnp.zeros((1, hidden), dtype=jnp.float32)
    b2 = jnp.zeros((1, action_space), dtype=jnp.float32)
    sigma_param = 10.0 * jnp.ones((1,), dtype=jnp.float32)  # only used for '2b'
    return (w1, b1, w2, b2, sigma_param)


def _mu_reference(x, params):
    w1, b1, w2, b2, _ = params
    return jnp.maximum(x @ w1 + b1, 0.0) @ w2 + b2


if __name__ == "__main__":
    state_space = 8
    action_space = 4

    key = jax.random.PRNGKey(0)
    pkey, xkey_s, xkey_b = jax.random.split(key, 3)
    params = init_policy_params(pkey, state_space, action_space)
    episode_number = jnp.asarray(100.0, dtype=jnp.float32)

    # --- small-batch path (no grid), std_mode '1' -----------------------------
    x_small = jax.random.normal(xkey_s, (8, state_space), dtype=jnp.float32)
    mu_s, sigma_s = policy_forward(x_small, params, episode_number, std_mode="1")
    jax.block_until_ready(mu_s)
    assert jnp.allclose(mu_s, _mu_reference(x_small, params), atol=1e-4, rtol=1e-4)
    assert jnp.allclose(sigma_s, 5.0)

    # --- batch-tiled path ('parallel' grid, ragged last tile), std_mode '2a' --
    x_big = jax.random.normal(xkey_b, (300, state_space), dtype=jnp.float32)
    mu_b, sigma_b = policy_forward(x_big, params, episode_number,
                                   std_mode="2a", batch_tile=128, oneshot_max=64)
    jax.block_until_ready(mu_b)
    assert mu_b.shape == (300, action_space)
    assert jnp.allclose(mu_b, _mu_reference(x_big, params), atol=1e-4, rtol=1e-4)
    assert jnp.allclose(sigma_b, 10.0 * jnp.exp(-0.0005 * 100.0), atol=1e-6)

    # --- std_mode '2b' (learnable sigma, softplus) -----------------------------
    mu_c, sigma_c = policy_forward(x_small, params, episode_number, std_mode="2b")
    jax.block_until_ready(sigma_c)
    assert jnp.allclose(sigma_c, jax.nn.softplus(jnp.float32(10.0)), atol=1e-6)

    print("KERNEL_OK")
</pallas_src>

<mosaic_0001>
module attributes {stable_mosaic.version = 11 : i64} {
  func.func @_policy_mlp_kernel(%arg0: memref<8x8xf32, #tpu.memory_space<vmem>>, %arg1: memref<8x64xf32, #tpu.memory_space<vmem>>, %arg2: memref<1x64xf32, #tpu.memory_space<vmem>>, %arg3: memref<64x4xf32, #tpu.memory_space<vmem>>, %arg4: memref<1x4xf32, #tpu.memory_space<vmem>>, %arg5: memref<8x4xf32, #tpu.memory_space<vmem>>) attributes {dimension_semantics = [], scalar_prefetch = 0 : i64, scratch_operands = 0 : i64, tpu.core_type = #tpu.core_type<tc>} {
    %c0 = arith.constant 0 : index
    %c0_0 = arith.constant 0 : index
    %0 = vector.load %arg0[%c0, %c0_0] : memref<8x8xf32, #tpu.memory_space<vmem>>, vector<8x8xf32>
    %c0_1 = arith.constant 0 : index
    %c0_2 = arith.constant 0 : index
    %1 = vector.load %arg1[%c0_1, %c0_2] : memref<8x64xf32, #tpu.memory_space<vmem>>, vector<8x64xf32>
    %cst = arith.constant dense<0.000000e+00> : vector<8x64xf32>
    %2 = tpu.matmul %0, %1, %cst {dimension_numbers = #tpu.dot_dimension_numbers<[1], [0], [0], [1], [0, 0, 1, 1], [], []>} : vector<8x8xf32>, vector<8x64xf32>, vector<8x64xf32> -> vector<8x64xf32>
    %c0_3 = arith.constant 0 : index
    %c0_4 = arith.constant 0 : index
    %3 = vector.load %arg2[%c0_3, %c0_4] : memref<1x64xf32, #tpu.memory_space<vmem>>, vector<1x64xf32>
    %4 = vector.broadcast %3 : vector<1x64xf32> to vector<8x64xf32>
    %5 = arith.addf %2, %4 : vector<8x64xf32>
    %cst_5 = arith.constant 0.000000e+00 : f32
    %6 = vector.broadcast %cst_5 : f32 to vector<8x64xf32>
    %7 = arith.maximumf %5, %6 : vector<8x64xf32>
    %c0_6 = arith.constant 0 : index
    %c0_7 = arith.constant 0 : index
    %8 = vector.load %arg3[%c0_6, %c0_7] : memref<64x4xf32, #tpu.memory_space<vmem>>, vector<64x4xf32>
    %cst_8 = arith.constant dense<0.000000e+00> : vector<8x4xf32>
    %9 = tpu.matmul %7, %8, %cst_8 {dimension_numbers = #tpu.dot_dimension_numbers<[1], [0], [0], [1], [0, 0, 1, 1], [], []>} : vector<8x64xf32>, vector<64x4xf32>, vector<8x4xf32> -> vector<8x4xf32>
    %c0_9 = arith.constant 0 : index
    %c0_10 = arith.constant 0 : index
    %10 = vector.load %arg4[%c0_9, %c0_10] : memref<1x4xf32, #tpu.memory_space<vmem>>, vector<1x4xf32>
    %11 = vector.broadcast %10 : vector<1x4xf32> to vector<8x4xf32>
    %12 = arith.addf %9, %11 : vector<8x4xf32>
    %c0_11 = arith.constant 0 : index
    %c0_12 = arith.constant 0 : index
    %13 = vector.load %arg5[%c0_11, %c0_12] : memref<8x4xf32, #tpu.memory_space<vmem>>, vector<8x4xf32>
    tpu.vector_store %arg5[%c0_11, %c0_12], %12 {strides = array<i32>} : memref<8x4xf32, #tpu.memory_space<vmem>>, vector<8x4xf32>,
    return
  }
}

</mosaic_0001>

<llo_original>
// kernel: policy_forward.1
$region0: #{policy_forward.1}
  #allocation0 [shape = 'u32[]', space=smem, size = 0x4, offset = 0x4, fixed_abs, tag = 'smem constant byte address 0x4 - core index']
  #allocation1 [shape = 'u32[144,128]{1,0:T(1,128)}', space=vmem, size = 0x12000, scoped, tag = 'internal scratch']
  %s0 = inlined_call_operand.vmem [shape: f32[8,8], index: 0, kind: input, shape index: {}]
  %s1 = inlined_call_operand.vmem [shape: f32[8,64], index: 1, kind: input, shape index: {}]
  %s2 = inlined_call_operand.vmem [shape: f32[1,64], index: 2, kind: input, shape index: {}]
  %s3 = inlined_call_operand.vmem [shape: f32[64,4], index: 3, kind: input, shape index: {}]
  %s4 = inlined_call_operand.vmem [shape: f32[1,4], index: 4, kind: input, shape index: {}]
  %s5 = inlined_call_operand.vmem [shape: f32[8,4], index: 5, kind: output, shape index: {}]
  %s6 = sld [smem:[#allocation0]]
  $region30: #{policy_forward.1} parent=0
    _
  %s8 = ssub.s32 1, %s6
  %s9 = scalar_select 0, %s8, %s6
  // Predicated region
  $region2: #{policy_forward.1} parent=0 // pred_check
    _
  $region3: #{policy_forward.1} parent=0 // pred_check_branch
    %11 = sbr.rel (0) target = $region5
  $region4: #{policy_forward.1} parent=0 // pred_region
    _
  $region5: #{policy_forward.1} parent=0 // pred_fallthru
    _
  // Predicated region
  $region6: #{policy_forward.1} parent=0 // pred_check
    _
  $region7: #{policy_forward.1} parent=0 // pred_check_branch
    %13 = sbr.rel (0) target = $region9
  $region8: #{policy_forward.1} parent=0 // pred_region
    _
  $region9: #{policy_forward.1} parent=0 // pred_fallthru
    _
  // Predicated region
  $region10: #{policy_forward.1} parent=0 // pred_check
    _
  $region11: #{policy_forward.1} parent=0 // pred_check_branch
    %15 = sbr.rel (0) target = $region13
  $region12: #{policy_forward.1} parent=0 // pred_region
    _
  $region13: #{policy_forward.1} parent=0 // pred_fallthru
    _
  // Predicated region
  $region14: #{policy_forward.1} parent=0 // pred_check
    _
  $region15: #{policy_forward.1} parent=0 // pred_check_branch
    %17 = sbr.rel (0) target = $region17
  $region16: #{policy_forward.1} parent=0 // pred_region
    _
  $region17: #{policy_forward.1} parent=0 // pred_fallthru
    _
  // Predicated region
  $region18: #{policy_forward.1} parent=0 // pred_check
    _
  $region19: #{policy_forward.1} parent=0 // pred_check_branch
    %19 = sbr.rel (0) target = $region21
  $region20: #{policy_forward.1} parent=0 // pred_region
    _
  $region21: #{policy_forward.1} parent=0 // pred_fallthru
    _
  %v20 = vld [vmem:[%s0] sm:$0xff]
  %v21 = vld [vmem:[%s1] sm:$0xff]
  %v22 = vld [vmem:[%s2] sm:$0x1]
  %v24 = vlaneseq
  %v25 = vshrl.u32 %v24, 7
  %v26 = vsub.s32 0, %v25
  %v27 = vrot.slane %v22, %v26
  %vm29 = vcmask 64512
  %v31 = vsel %vm29, %v20, 0
  %33 = vmatprep.subr.mxu0 0.0
  %34 = vmatpush1.msra.mxu0 %v21
  %35 = vmatprep.subr.mxu0 0.0
  %36 = vmatpush1.msra.mxu0 0.0
  %37 = vmatprep.subr.mxu0 0.0
  %38 = vmatpush1.msra.mxu0 0.0
  %39 = vmatprep.subr.mxu0 0.0
  %40 = vmatpush1.msra.mxu0 0.0
  %41 = vmatprep.subr.mxu0 0.0
  %42 = vmatpush1.msra.mxu0 0.0
  %43 = vmatprep.subr.mxu0 0.0
  %44 = vmatpush1.msra.mxu0 0.0
  %45 = vmatprep.subr.mxu0 0.0
  %46 = vmatpush1.msra.mxu0 0.0
  %47 = vmatprep.subr.mxu0 0.0
  %48 = vmatpush1.msra.mxu0 0.0
  %49 = vmatprep.subr.mxu0 0.0
  %50 = vmatpush1.msra.mxu0 0.0
  %51 = vmatprep.subr.mxu0 0.0
  %52 = vmatpush1.msra.mxu0 0.0
  %53 = vmatprep.subr.mxu0 0.0
  %54 = vmatpush1.msra.mxu0 0.0
  %55 = vmatprep.subr.mxu0 0.0
  %56 = vmatpush1.msra.mxu0 0.0
  %57 = vmatprep.subr.mxu0 0.0
  %58 = vmatpush1.msra.mxu0 0.0
  %59 = vmatprep.subr.mxu0 0.0
  %60 = vmatpush1.msra.mxu0 0.0
  %61 = vmatprep.subr.mxu0 0.0
  %62 = vmatpush1.msra.mxu0 0.0
  %63 = vmatprep.subr.mxu0 0.0
  %64 = vmatpush1.msra.mxu0 0.0
  %65 = vmatprep.subr.mxu0 0.0
  %66 = vmatpush1.msra.mxu0 0.0
  %67 = vmatprep.subr.mxu0 0.0
  %68 = vmatpush1.msra.mxu0 0.0
  %69 = vmatprep.subr.mxu0 0.0
  %70 = vmatpush1.msra.mxu0 0.0
  %71 = vmatprep.subr.mxu0 0.0
  %72 = vmatpush1.msra.mxu0 0.0
  %73 = vmatprep.subr.mxu0 0.0
  %74 = vmatpush1.msra.mxu0 0.0
  %75 = vmatprep.subr.mxu0 0.0
  %76 = vmatpush1.msra.mxu0 0.0
  %77 = vmatprep.subr.mxu0 0.0
  %78 = vmatpush1.msra.mxu0 0.0
  %79 = vmatprep.subr.mxu0 0.0
  %80 = vmatpush1.msra.mxu0 0.0
  %81 = vmatprep.subr.mxu0 0.0
  %82 = vmatpush1.msra.mxu0 0.0
  %83 = vmatprep.subr.mxu0 0.0
  %84 = vmatpush1.msra.mxu0 0.0
  %85 = vmatprep.subr.mxu0 0.0
  %86 = vmatpush1.msra.mxu0 0.0
  %87 = vmatprep.subr.mxu0 0.0
  %88 = vmatpush1.msra.mxu0 0.0
  %89 = vmatprep.subr.mxu0 0.0
  %90 = vmatpush1.msra.mxu0 0.0
  %91 = vmatprep.subr.mxu0 0.0
  %92 = vmatpush1.msra.mxu0 0.0
  %93 = vmatprep.subr.mxu0 0.0
  %94 = vmatpush1.msra.mxu0 0.0
  %95 = vmatprep.subr.mxu0 0.0
  %96 = vmatpush1.msra.mxu0 0.0
  %97 = vmatprep.mubr.f32.mxu0 0.0
  %98 = vmatmul.mubr.f32.gmra.mrb[0].mxu0 %v31
  %v99 = vpop.f32.mrb[0].mxu0
  %v100 = vadd.f32 %v27, %v99
  %v101 = vpop.f32.mrb[0].mxu0
  %102 = vdwg.mxu0
  %v103 = vmax.f32 %v100, 0.0
  %v104 = vld [vmem:[%s3] sm:$0xff]
  %v105 = vld [vmem:[%s3 + $0x8] sm:$0xff]
  %v106 = vld [vmem:[%s3 + $0x10] sm:$0xff]
  %v107 = vld [vmem:[%s3 + $0x18] sm:$0xff]
  %v108 = vld [vmem:[%s3 + $0x20] sm:$0xff]
  %v109 = vld [vmem:[%s3 + $0x28] sm:$0xff]
  %v110 = vld [vmem:[%s3 + $0x30] sm:$0xff]
  %v111 = vld [vmem:[%s3 + $0x38] sm:$0xff]
  %v112 = vld [vmem:[%s4] sm:$0x1]
  %v114 = vlaneseq
  %v115 = vshrl.u32 %v114, 7
  %v116 = vsub.s32 0, %v115
  %v117 = vrot.slane %v112, %v116
  %vm119 = vcmask 523264
  %v121 = vsel %vm119, %v103, 0
  %123 = vmatprep.subr.mxu0 0.0
  %124 = vmatpush1.msra.mxu0 %v104
  %125 = vmatprep.subr.mxu0 0.0
  %126 = vmatpush1.msra.mxu0 %v105
  %127 = vmatprep.subr.mxu0 0.0
  %128 = vmatpush1.msra.mxu0 %v106
  %129 = vmatprep.subr.mxu0 0.0
  %130 = vmatpush1.msra.mxu0 %v107
  %131 = vmatprep.subr.mxu0 0.0
  %132 = vmatpush1.msra.mxu0 %v108
  %133 = vmatprep.subr.mxu0 0.0
  %134 = vmatpush1.msra.mxu0 %v109
  %135 = vmatprep.subr.mxu0 0.0
  %136 = vmatpush1.msra.mxu0 %v110
  %137 = vmatprep.subr.mxu0 0.0
  %138 = vmatpush1.msra.mxu0 %v111
  %139 = vmatprep.subr.mxu0 0.0
  %140 = vmatpush1.msra.mxu0 0.0
  %141 = vmatprep.subr.mxu0 0.0
  %142 = vmatpush1.msra.mxu0 0.0
  %143 = vmatprep.subr.mxu0 0.0
  %144 = vmatpush1.msra.mxu0 0.0
  %145 = vmatprep.subr.mxu0 0.0
  %146 = vmatpush1.msra.mxu0 0.0
  %147 = vmatprep.subr.mxu0 0.0
  %148 = vmatpush1.msra.mxu0 0.0
  %149 = vmatprep.subr.mxu0 0.0
  %150 = vmatpush1.msra.mxu0 0.0
  %151 = vmatprep.subr.mxu0 0.0
  %152 = vmatpush1.msra.mxu0 0.0
  %153 = vmatprep.subr.mxu0 0.0
  %154 = vmatpush1.msra.mxu0 0.0
  %155 = vmatprep.subr.mxu0 0.0
  %156 = vmatpush1.msra.mxu0 0.0
  %157 = vmatprep.subr.mxu0 0.0
  %158 = vmatpush1.msra.mxu0 0.0
  %159 = vmatprep.subr.mxu0 0.0
  %160 = vmatpush1.msra.mxu0 0.0
  %161 = vmatprep.subr.mxu0 0.0
  %162 = vmatpush1.msra.mxu0 0.0
  %163 = vmatprep.subr.mxu0 0.0
  %164 = vmatpush1.msra.mxu0 0.0
  %165 = vmatprep.subr.mxu0 0.0
  %166 = vmatpush1.msra.mxu0 0.0
  %167 = vmatprep.subr.mxu0 0.0
  %168 = vmatpush1.msra.mxu0 0.0
  %169 = vmatprep.subr.mxu0 0.0
  %170 = vmatpush1.msra.mxu0 0.0
  %171 = vmatprep.subr.mxu0 0.0
  %172 = vmatpush1.msra.mxu0 0.0
  %173 = vmatprep.subr.mxu0 0.0
  %174 = vmatpush1.msra.mxu0 0.0
  %175 = vmatprep.subr.mxu0 0.0
  %176 = vmatpush1.msra.mxu0 0.0
  %177 = vmatprep.subr.mxu0 0.0
  %178 = vmatpush1.msra.mxu0 0.0
  %179 = vmatprep.subr.mxu0 0.0
  %180 = vmatpush1.msra.mxu0 0.0
  %181 = vmatprep.subr.mxu0 0.0
  %182 = vmatpush1.msra.mxu0 0.0
  %183 = vmatprep.subr.mxu0 0.0
  %184 = vmatpush1.msra.mxu0 0.0
  %185 = vmatprep.subr.mxu0 0.0
  %186 = vmatpush1.msra.mxu0 0.0
  %187 = vmatprep.mubr.f32.mxu0 0.0
  %188 = vmatmul.mubr.f32.gmra.mrb[0].mxu0 %v121
  %v189 = vpop.f32.mrb[0].mxu0
  %v190 = vadd.f32 %v117, %v189
  %v191 = vpop.f32.mrb[0].mxu0
  %192 = vdwg.mxu0
  %vm193 = vcmask 31744
  %194 = vst.msk [vmem:[%s5] sm:$0xff] %vm193, %v190
  // Predicated region
  $region22: #{policy_forward.1} parent=0 // pred_check
    _
  $region23: #{policy_forward.1} parent=0 // pred_check_branch
    %196 = sbr.rel (0) target = $region25
  $region24: #{policy_forward.1} parent=0 // pred_region
    _
  $region25: #{policy_forward.1} parent=0 // pred_fallthru
    _
  // Predicated region
  $region26: #{policy_forward.1} parent=0 // pred_check
    _
  $region27: #{policy_forward.1} parent=0 // pred_check_branch
    %198 = sbr.rel (0) target = $region29
  $region28: #{policy_forward.1} parent=0 // pred_region
    _
  $region29: #{policy_forward.1} parent=0 // pred_fallthru
    _

</llo_original>
